<compile_context>
chip_gen: v7x
topology: tpu7x:2x2x1
jax: 0.10.0
libtpu: 0.0.40
codegen_flags: <defaults>
</compile_context>

<pallas_src>
import functools

import jax
import jax.numpy as jnp
from jax.experimental import pallas as pl
from jax.experimental.pallas import tpu as pltpu


def _round_up(x, m):
    return ((x + m - 1) // m) * m


def _cdiv(a, b):
    return (a + b - 1) // b


def _split_dim(n, target, align, min_tiles=1):
    """Tile-count-first split of extent `n` into `t` tiles of size `tile`.

    Minimizes zero padding for ragged n (e.g. N=300, target=512 -> one 304 tile,
    not a 512 one). `tile` is a multiple of `align` unless there is a single
    tile, in which case it equals the (8-aligned) full extent (full-dim blocks
    are exempt from the (8,128) divisibility rule).
    """
    t = max(min_tiles, _cdiv(n, target))
    if t == 1:
        tile = _round_up(n, 8)
    else:
        tile = _round_up(_cdiv(n, t), align)
        t = _cdiv(n, tile)
    return t, tile


def _gcn_kernel(g_ref, h_ref, w_ref, b_ref, o_ref, acc_ref, *, tk, compute_dtype):
    """One (batch, row-tile, k-tile) grid step of relu((g @ h) @ W + b).

    g_ref : (tm, tk)           g's native dtype; cast per-tile below
    h_ref : (n_cols, din_p)    resident compute-dtype slab for this batch
    w_ref : (din_p, dout_p)    compute dtype
    b_ref : (1, dout_p)        f32
    o_ref : (tm, dout_p)       out dtype
    acc_ref: (tm, din_p)       f32 accumulator for g @ h over k tiles
    NOTE: correctness requires k == innermost grid axis, out index_map k-invariant.
    """
    k = pl.program_id(2)

    @pl.when(k == 0)
    def _init():
        acc_ref[...] = jnp.zeros_like(acc_ref)

    # Per-tile cast of g (HBM keeps the caller's dtype -> g streamed only once).
    g_tile = g_ref[...].astype(compute_dtype)
    start = pl.multiple_of(k * tk, tk)
    h_tile = h_ref[pl.ds(start, tk), :]          # k-chunk of the resident h slab
    acc_ref[...] += jnp.dot(g_tile, h_tile, preferred_element_type=jnp.float32)

    @pl.when(k == pl.num_programs(2) - 1)
    def _finalize():
        # bf16 projection input + f32 accumulation is the native MXU fast path
        # on v5e / v6e / v7x (f32 matmul is multi-pass) -- keep this cast.
        gh = acc_ref[...].astype(compute_dtype)
        out = jnp.dot(gh, w_ref[...], preferred_element_type=jnp.float32)
        out = out + b_ref[...]                    # f32 bias, broadcasts over rows
        o_ref[...] = jnp.maximum(out, 0.0).astype(o_ref.dtype)


def gcn_forward(g, h, w, b, *, compute_dtype=jnp.bfloat16, out_dtype=None,
                tm_target=512, tk_target=1024):
    """relu((g @ h) @ W + b), batched over the leading axis.

    g: [B,N,N], h: [B,N,Din], w: [Din,Dout], b: [Dout] -> [B,N,Dout].
    out_dtype defaults to h.dtype; pass jnp.bfloat16 to halve output writeback.
    """
    B, N, N2 = g.shape
    assert N == N2 and h.shape[:2] == (B, N)
    Din, Dout = w.shape
    assert h.shape[2] == Din
    out_dtype = h.dtype if out_dtype is None else out_dtype

    din_p = _round_up(Din, 128)                 # lane-dense feature dims
    dout_p = _round_up(Dout, 128)

    g_item = jnp.dtype(g.dtype).itemsize
    c_item = jnp.dtype(compute_dtype).itemsize
    o_item = jnp.dtype(out_dtype).itemsize

    # Keep both v7x TensorCores busy: B * n_row_tiles must be >= 2 if possible.
    min_row_tiles = 2 if (B < 2 and N > 8) else 1

    # Conservative working-set budget: fits v7x's 64 MiB physical VMEM with
    # headroom, trivially fits v5e/v6e's 128 MiB.
    VMEM_BUDGET = 44 * 1024 * 1024

    while True:
        n_rt, tm = _split_dim(N, tm_target, 8, min_tiles=min_row_tiles)
        n_kt, tk = _split_dim(N, tk_target, 128)
        n_rows, n_cols = n_rt * tm, n_kt * tk
        g_pad = (n_rows != N) or (n_cols != N)
        g_kernel_item = c_item if g_pad else g_item   # padded path also casts
        vmem_est = (
            3 * tm * tk * g_kernel_item          # g tiles (Buffered(3))
            + 2 * n_cols * din_p * c_item        # resident h slab (2 bufs over batch)
            + 1 * din_p * dout_p * c_item        # W (Buffered(1), grid-invariant)
            + 1 * dout_p * 4                     # bias
            + tm * din_p * 4                     # f32 accumulator scratch
            + 2 * tm * dout_p * o_item           # output tiles
        )
        if vmem_est <= VMEM_BUDGET or (tk_target <= 256 and tm_target <= 128):
            break
        if tk_target > 256:
            tk_target //= 2
        else:
            tm_target //= 2
    # TODO(synk): for extreme N*Din the resident-h slab could still overflow
    # v7x VMEM; a streamed-h fallback BlockSpec would be needed there.

    vmem_limit = int(min(max(vmem_est + (vmem_est >> 2) + (8 << 20), 16 << 20),
                         60 << 20))

    # ---- padding (zero padding is mathematically inert for the matmuls) -----
    if g_pad:
        # Pad is unavoidable for ragged N; combine it with the bf16 cast so the
        # extra HBM pass moves compute-dtype (2-byte) elements.
        gp = jnp.pad(g.astype(compute_dtype),
                     ((0, 0), (0, n_rows - N), (0, n_cols - N)))
    else:
        gp = g                                   # streamed once, cast in-kernel
    hp = jnp.pad(h, ((0, 0), (0, n_cols - N), (0, din_p - Din))).astype(compute_dtype)
    wp = jnp.pad(w, ((0, din_p - Din), (0, dout_p - Dout))).astype(compute_dtype)
    bp = jnp.pad(b, (0, dout_p - Dout)).astype(jnp.float32).reshape(1, dout_p)

    grid = (B, n_rt, n_kt)

    cost = pl.CostEstimate(
        flops=2 * B * N * N * Din + 2 * B * N * Din * Dout,
        transcendentals=0,
        bytes_accessed=int(gp.size) * jnp.dtype(gp.dtype).itemsize
        + int(hp.size) * c_item
        + int(wp.size) * c_item
        + B * n_rows * dout_p * o_item,
    )

    kernel = functools.partial(_gcn_kernel, tk=tk, compute_dtype=compute_dtype)

    def _call(multibuffer):
        def spec(shape, imap, buffers=None):
            if multibuffer and buffers is not None:
                return pl.BlockSpec(shape, imap, pipeline_mode=pl.Buffered(buffers))
            return pl.BlockSpec(shape, imap)

        return pl.pallas_call(
            kernel,
            out_shape=jax.ShapeDtypeStruct((B, n_rows, dout_p), out_dtype),
            grid_spec=pltpu.PrefetchScalarGridSpec(
                num_scalar_prefetch=0,
                grid=grid,
                in_specs=[
                    # g: one (tm, tk) tile per (batch, row, k) step, batch squeezed.
                    spec((None, tm, tk), lambda bb, i, k: (bb, i, k), buffers=3),
                    # h: full padded slab per batch; i-/k-invariant index -> one DMA
                    # per batch, k-chunk sliced in-kernel.
                    spec((None, n_cols, din_p), lambda bb, i, k: (bb, 0, 0)),
                    # W, bias: grid-invariant -> single buffer (DMA'd once).
                    spec((din_p, dout_p), lambda bb, i, k: (0, 0), buffers=1),
                    spec((1, dout_p), lambda bb, i, k: (0, 0), buffers=1),
                ],
                out_specs=spec((None, tm, dout_p), lambda bb, i, k: (bb, i, 0)),
                scratch_shapes=[pltpu.VMEM((tm, din_p), jnp.float32)],
            ),
            compiler_params=pltpu.CompilerParams(
                dimension_semantics=("parallel", "parallel", "arbitrary"),
                vmem_limit_bytes=vmem_limit,
            ),
            cost_estimate=cost,
        )(gp, hp, wp, bp)

    try:
        out_padded = _call(True)
    except Exception:
        # pl.Buffered hints are a minor optimization; fall back to default
        # double-buffering if this JAX/Mosaic build rejects pipeline_mode.
        out_padded = _call(False)

    # Padded rows beyond N hold relu(b) (not zeros); always slice before use.
    return out_padded[:, :N, :Dout]


if __name__ == "__main__":
    # Small shapes consistent with the module's forward.
    B, N, IN_DIM, OUT_DIM = 2, 16, 32, 32

    key = jax.random.PRNGKey(0)
    kg, kh, kw, kb = jax.random.split(key, 4)

    g = jax.random.normal(kg, (B, N, N), dtype=jnp.float32)
    h = jax.random.normal(kh, (B, N, IN_DIM), dtype=jnp.float32)
    # proj.weight is [out_dim, in_dim] in PyTorch; we store W = weight.T.
    w = jax.random.normal(kw, (IN_DIM, OUT_DIM), dtype=jnp.float32) * 0.1
    b = jax.random.normal(kb, (OUT_DIM,), dtype=jnp.float32) * 0.1

    # Full-precision reference (module semantics: p=0 dropout, ReLU activation).
    hi = jax.lax.Precision.HIGHEST
    ref_f32 = jnp.maximum(
        jnp.einsum("bnm,bmd->bnd", g, h, precision=hi) @ w + b, 0.0)

    # --- bf16-compute kernel (production default), f32 output ---------------
    out = jax.block_until_ready(gcn_forward(g, h, w, b))
    assert out.shape == (B, N, OUT_DIM)

    # Emulate the kernel's bf16-input / f32-accumulate path for a tight check.
    gb = g.astype(jnp.bfloat16).astype(jnp.float32)
    hb = h.astype(jnp.bfloat16).astype(jnp.float32)
    wb = w.astype(jnp.bfloat16).astype(jnp.float32)
    gh = jnp.einsum("bnm,bmd->bnd", gb, hb, precision=hi)
    gh = gh.astype(jnp.bfloat16).astype(jnp.float32)
    ref_bf16 = jnp.maximum(jnp.einsum("bnd,de->bne", gh, wb, precision=hi) + b, 0.0)
    assert jnp.allclose(out.astype(jnp.float32), ref_bf16, atol=2e-2, rtol=2e-2)
    # Loose sanity check against the full-f32 reference (bf16 rounding budget).
    assert jnp.allclose(out.astype(jnp.float32), ref_f32, atol=2.5e-1, rtol=1e-1)

    # --- bf16 output path (halved writeback traffic) -------------------------
    out_bf16 = jax.block_until_ready(
        gcn_forward(g, h, w, b, out_dtype=jnp.bfloat16))
    assert out_bf16.dtype == jnp.bfloat16
    assert jnp.allclose(out_bf16.astype(jnp.float32), ref_bf16,
                        atol=5e-2, rtol=5e-2)

    # --- f32-compute kernel ---------------------------------------------------
    out_f32 = jax.block_until_ready(
        gcn_forward(g, h, w, b, compute_dtype=jnp.float32))
    # MXU default precision for f32 matmuls is backend-dependent, so use a
    # tolerance that covers either lowering.
    assert jnp.allclose(out_f32, ref_f32, atol=2.5e-1, rtol=1e-1)

    print("KERNEL_OK")
</pallas_src>

<mosaic_0001>
module attributes {stable_mosaic.version = 11 : i64} {
  func.func @_gcn_kernel(%arg0: i32, %arg1: i32, %arg2: i32, %arg3: memref<1x16x16xf32, #tpu.memory_space<vmem>>, %arg4: memref<1x16x128xbf16, #tpu.memory_space<vmem>>, %arg5: memref<128x128xbf16, #tpu.memory_space<vmem>>, %arg6: memref<1x128xf32, #tpu.memory_space<vmem>>, %arg7: memref<1x16x128xf32, #tpu.memory_space<vmem>>, %arg8: memref<16x128xf32, #tpu.memory_space<vmem>>) attributes {dimension_semantics = [#tpu.dimension_semantics<parallel>, #tpu.dimension_semantics<parallel>, #tpu.dimension_semantics<arbitrary>], iteration_bounds = array<i64: 2, 1, 1>, scalar_prefetch = 0 : i64, scratch_operands = 1 : i64, tpu.core_type = #tpu.core_type<tc>, window_params = [{transform_indices = @transform_0, window_bounds = array<i64: 1, 16, 16>}, {transform_indices = @transform_1, window_bounds = array<i64: 1, 16, 128>}, {pipeline_mode = #tpu.pipeline_mode<synchronous>, transform_indices = @transform_2, window_bounds = array<i64: 128, 128>}, {pipeline_mode = #tpu.pipeline_mode<synchronous>, transform_indices = @transform_3, window_bounds = array<i64: 1, 128>}, {transform_indices = @transform_4, window_bounds = array<i64: 1, 16, 128>}]} {
    %c0_i32 = arith.constant 0 : i32
    %0 = arith.cmpi eq, %arg2, %c0_i32 : i32
    %1 = arith.extui %0 : i1 to i32
    %c0_i32_0 = arith.constant 0 : i32
    %2 = arith.cmpi ne, %1, %c0_i32_0 : i32
    scf.if %2 {
      %cst_11 = arith.constant 0.000000e+00 : f32
      %18 = vector.broadcast %cst_11 : f32 to vector<16x128xf32>
      %c0_12 = arith.constant 0 : index
      %c0_13 = arith.constant 0 : index
      %19 = vector.load %arg8[%c0_12, %c0_13] : memref<16x128xf32, #tpu.memory_space<vmem>>, vector<16x128xf32>
      tpu.vector_store %arg8[%c0_12, %c0_13], %18 {strides = array<i32>} : memref<16x128xf32, #tpu.memory_space<vmem>>, vector<16x128xf32>,
    } else {
    }
    %c0 = arith.constant 0 : index
    %c0_1 = arith.constant 0 : index
    %c0_2 = arith.constant 0 : index
    %3 = vector.load %arg3[%c0, %c0_1, %c0_2] : memref<1x16x16xf32, #tpu.memory_space<vmem>>, vector<1x16x16xf32>
    %4 = vector.shape_cast %3 : vector<1x16x16xf32> to vector<16x16xf32>
    %5 = arith.truncf %4 : vector<16x16xf32> to vector<16x16xbf16>
    %c16_i32 = arith.constant 16 : i32
    %6 = arith.muli %arg2, %c16_i32 : i32
    %7 = tpu.assume_multiple %6, 16 : i32
    %c0_3 = arith.constant 0 : index
    %8 = arith.index_cast %7 : i32 to index
    %c0_4 = arith.constant 0 : index
    %9 = vector.load %arg4[%c0_3, %8, %c0_4] : memref<1x16x128xbf16, #tpu.memory_space<vmem>>, vector<1x16x128xbf16>
    %10 = vector.shape_cast %9 : vector<1x16x128xbf16> to vector<16x128xbf16>
    %c0_5 = arith.constant 0 : index
    %c0_6 = arith.constant 0 : index
    %11 = vector.load %arg8[%c0_5, %c0_6] : memref<16x128xf32, #tpu.memory_space<vmem>>, vector<16x128xf32>
    %cst = arith.constant dense<0.000000e+00> : vector<16x128xf32>
    %12 = tpu.matmul %5, %10, %cst {dimension_numbers = #tpu.dot_dimension_numbers<[1], [0], [0], [1], [0, 0, 1, 1], [], []>} : vector<16x16xbf16>, vector<16x128xbf16>, vector<16x128xf32> -> vector<16x128xf32>
    %13 = arith.addf %11, %12 : vector<16x128xf32>
    %c0_7 = arith.constant 0 : index
    %c0_8 = arith.constant 0 : index
    %14 = vector.load %arg8[%c0_7, %c0_8] : memref<16x128xf32, #tpu.memory_space<vmem>>, vector<16x128xf32>
    tpu.vector_store %arg8[%c0_7, %c0_8], %13 {strides = array<i32>} : memref<16x128xf32, #tpu.memory_space<vmem>>, vector<16x128xf32>,
    %c0_i32_9 = arith.constant 0 : i32
    %15 = arith.cmpi eq, %arg2, %c0_i32_9 : i32
    %16 = arith.extui %15 : i1 to i32
    %c0_i32_10 = arith.constant 0 : i32
    %17 = arith.cmpi ne, %16, %c0_i32_10 : i32
    scf.if %17 {
      %c0_11 = arith.constant 0 : index
      %c0_12 = arith.constant 0 : index
      %18 = vector.load %arg8[%c0_11, %c0_12] : memref<16x128xf32, #tpu.memory_space<vmem>>, vector<16x128xf32>
      %19 = arith.truncf %18 : vector<16x128xf32> to vector<16x128xbf16>
      %c0_13 = arith.constant 0 : index
      %c0_14 = arith.constant 0 : index
      %20 = vector.load %arg5[%c0_13, %c0_14] : memref<128x128xbf16, #tpu.memory_space<vmem>>, vector<128x128xbf16>
      %cst_15 = arith.constant dense<0.000000e+00> : vector<16x128xf32>
      %21 = tpu.matmul %19, %20, %cst_15 {dimension_numbers = #tpu.dot_dimension_numbers<[1], [0], [0], [1], [0, 0, 1, 1], [], []>} : vector<16x128xbf16>, vector<128x128xbf16>, vector<16x128xf32> -> vector<16x128xf32>
      %c0_16 = arith.constant 0 : index
      %c0_17 = arith.constant 0 : index
      %22 = vector.load %arg6[%c0_16, %c0_17] : memref<1x128xf32, #tpu.memory_space<vmem>>, vector<1x128xf32>
      %23 = vector.broadcast %22 : vector<1x128xf32> to vector<16x128xf32>
      %24 = arith.addf %21, %23 : vector<16x128xf32>
      %cst_18 = arith.constant 0.000000e+00 : f32
      %25 = vector.broadcast %cst_18 : f32 to vector<16x128xf32>
      %26 = arith.maximumf %24, %25 : vector<16x128xf32>
      %c0_19 = arith.constant 0 : index
      %c0_20 = arith.constant 0 : index
      %c0_21 = arith.constant 0 : index
      %27 = vector.load %arg7[%c0_19, %c0_20, %c0_21] : memref<1x16x128xf32, #tpu.memory_space<vmem>>, vector<1x16x128xf32>
      %28 = vector.shape_cast %27 : vector<1x16x128xf32> to vector<16x128xf32>
      %29 = vector.shape_cast %26 : vector<16x128xf32> to vector<1x16x128xf32>
      tpu.vector_store %arg7[%c0_19, %c0_20, %c0_21], %29 {strides = array<i32>} : memref<1x16x128xf32, #tpu.memory_space<vmem>>, vector<1x16x128xf32>,
    } else {
    }
    return
  }
  func.func @transform_0(%arg0: i32, %arg1: i32, %arg2: i32) -> (i32, i32, i32) {
    %c0_i32 = arith.constant 0 : i32
    return %arg0, %arg1, %arg2 : i32, i32, i32
  }
  func.func @transform_1(%arg0: i32, %arg1: i32, %arg2: i32) -> (i32, i32, i32) {
    %c0_i32 = arith.constant 0 : i32
    %c0_i32_0 = arith.constant 0 : i32
    %c0_i32_1 = arith.constant 0 : i32
    return %arg0, %c0_i32, %c0_i32_0 : i32, i32, i32
  }
  func.func @transform_2(%arg0: i32, %arg1: i32, %arg2: i32) -> (i32, i32) {
    %c0_i32 = arith.constant 0 : i32
    %c0_i32_0 = arith.constant 0 : i32
    %c0_i32_1 = arith.constant 0 : i32
    return %c0_i32, %c0_i32_0 : i32, i32
  }
  func.func @transform_3(%arg0: i32, %arg1: i32, %arg2: i32) -> (i32, i32) {
    %c0_i32 = arith.constant 0 : i32
    %c0_i32_0 = arith.constant 0 : i32
    %c0_i32_1 = arith.constant 0 : i32
    return %c0_i32, %c0_i32_0 : i32, i32
  }
  func.func @transform_4(%arg0: i32, %arg1: i32, %arg2: i32) -> (i32, i32, i32) {
    %c0_i32 = arith.constant 0 : i32
    %c0_i32_0 = arith.constant 0 : i32
    return %arg0, %arg1, %c0_i32 : i32, i32, i32
  }
}

</mosaic_0001>

<llo_original>
// kernel: tpu_custom_call.1
$region0: #{tpu_custom_call.1}
  #allocation0 [shape = 'u32[]', space=smem, size = 0x4, offset = 0x4, fixed_abs, tag = 'smem constant byte address 0x4 - core index']
  #allocation1 [shape = 'u32[144,128]{1,0:T(1,128)}', space=vmem, size = 0x12000, scoped, tag = 'internal scratch']
  #allocation2 [shape = 'f32[16,128]{1,0:T(8,128)}', space=vmem, size = 0x2000, scoped, tag = 'scratch operand']
  %s0 = inlined_call_operand.hbm [shape: f32[2,16,16], index: 0, kind: input, shape index: {}]
  %s1 = inlined_call_operand.hbm [shape: bf16[2,16,128], index: 1, kind: input, shape index: {}]
  %s2 = inlined_call_operand.hbm [shape: bf16[128,128], index: 2, kind: input, shape index: {}]
  %s3 = inlined_call_operand.vmem [shape: f32[1,128], index: 3, kind: input, shape index: {}]
  %s4 = inlined_call_operand.hbm [shape: f32[2,16,128], index: 4, kind: output, shape index: {}]
  %s5 = sld [smem:[#allocation0]]
  $region69: #{tpu_custom_call.1} parent=0
    _
  %s7 = ssub.s32 1, %s5
  %s8 = scalar_select 0, %s7, %s5
  $region1: #{tpu_custom_call.1} parent=0
    #allocation3 [shape = 'u8[16384]{0}', space=vmem, size = 0x4000, scoped, tag = 'input window, operand 0']
    #allocation4 [shape = 's32[2]{0}', space=sflag, size = 0x8, scoped, tag = 'scoped memory for tpu_custom_call.1']
    #allocation5 [shape = 's32[2]{0}', space=sflag, size = 0x8, scoped, tag = 'scoped memory for tpu_custom_call.1']
    #allocation6 [shape = 'u8[8192]{0}', space=vmem, size = 0x2000, scoped, tag = 'input window, operand 1']
    #allocation7 [shape = 's32[2]{0}', space=sflag, size = 0x8, scoped, tag = 'scoped memory for tpu_custom_call.1']
    #allocation8 [shape = 'u8[32768]{0}', space=vmem, size = 0x8000, scoped, tag = 'input window, operand 2, single buffered']
    #allocation9 [shape = 'u8[16384]{0}', space=vmem, size = 0x4000, scoped, tag = 'output window, operand 0']
    %9 = vsyncpa [#allocation4], 0
    %s10 = scalar_lea.sflag [#allocation4], 1
    %11 = vsyncpa %s10, 0
    %12 = vsyncpa [#allocation7], 0
    %s13 = scalar_lea.sflag [#allocation7], 1
    %14 = vsyncpa %s13, 0
    %15 = vsyncpa [#allocation5], 0
    %s16 = scalar_lea.sflag [#allocation5], 1
    %17 = vsyncpa %s16, 0
    loop: start=0, step=1, limit=4
    $region2: #{tpu_custom_call.1} parent=1 // loop_pre_header
      _
    $region3: #{tpu_custom_call.1} parent=1 // loop_header
      %s19 = sphi 0, %s23
      %p20 = scmp.ge.s32.totalorder %s19, 4
      %s26 = sphi 0, %s45
      %s27 = sphi 0, %s41
      %s28 = sphi 0, %s37
      %s29 = sphi 0, %s26
      %s30 = sphi 0, %s27
      %s31 = sphi 0, %s28
      %s32 = sphi 0, %s29
      %s33 = sphi 0, %s30
      %s34 = sphi 0, %s31
      %s52 = sphi 0, %s54
      %s55 = sphi 0, %s52
      %s56 = sphi 0, %s55
      %s72 = sphi 0, %s56
      %s78 = sphi 0, %s80
      %s81 = sphi 0, %s78
      %s82 = sphi 0, %s81
      %s98 = sphi 0, %s82
      %s102 = sphi 0, %s102
      %s104 = sphi 0, %s102
      %s105 = sphi 0, %s104
      %s119 = sphi 0, %s105
      %s123 = sphi 0, %s123
      %s125 = sphi 0, %s123
      %s126 = sphi 0, %s125
      %s140 = sphi 0, %s126
      %s148 = sphi 0, %s150
      %s151 = sphi 0, %s148
      %s152 = sphi 0, %s151
      %s168 = sphi 0, %s152
    $region4: #{tpu_custom_call.1} parent=1 // loop_header_branch
      %22 = sbr.rel (%p20) target = $region8
    $region5: #{tpu_custom_call.1} parent=1 // loop_body
      %s24 = ssub.s32 %s19, 1
      %s25 = ssub.s32 %s19, 2
      %s35 = sadd.s32 1, %s28
      %p36 = scmp.ge.s32.totalorder %s35, 1
      %s37 = scalar_select %p36, 0, %s35
      %s38 = sadd.s32 1, %s27
      %s39 = scalar_select %p36, %s38, %s27
      %p40 = scmp.ge.s32.totalorder %s39, 1
      %s41 = scalar_select %p40, 0, %s39
      %s42 = sadd.s32 1, %s26
      %s43 = scalar_select %p40, %s42, %s26
      %p44 = scmp.ge.s32.totalorder %s43, 2
      %s45 = scalar_select %p44, 0, %s43
      %s46 = ssub.s32 %s26, %s45
      %s47 = ssub.s32 %s27, %s41
      %s48 = sor.u32 %s46, %s47
      %s49 = ssub.s32 %s28, %s37
      %s50 = sor.u32 %s48, %s49
      %p51 = scmp.eq.s32.totalorder %s50, 0
      %s53 = sadd.s32 %s52, 1
      %s54 = scalar_select %p51, %s52, %s53
      %p57 = pneg %p51
      %p58 = scmp.eq.s32.totalorder %s19, 1
      %p59 = por %p57, %p58
      %p60 = scmp.ne.s32.totalorder %s52, %s55
      %p61 = scmp.eq.s32.totalorder %s19, 0
      %p62 = por %p60, %p61
      %p63 = scmp.ne.s32.totalorder %s52, %s55
      %p64 = scmp.eq.s32.totalorder %s24, 1
      %p65 = por %p63, %p64
      %p66 = scmp.ne.s32.totalorder %s55, %s56
      %p67 = scmp.eq.s32.totalorder %s24, 0
      %p68 = por %p66, %p67
      %p69 = scmp.ne.s32.totalorder %s55, %s56
      %p70 = scmp.eq.s32.totalorder %s25, 1
      %p71 = por %p69, %p70
      %p73 = scmp.ne.s32.totalorder %s56, %s72
      %p74 = scmp.eq.s32.totalorder %s25, 0
      %p75 = por %p73, %p74
      %s76 = ssub.s32 %s26, %s45
      %p77 = scmp.eq.s32.totalorder %s76, 0
      %s79 = sadd.s32 %s78, 1
      %s80 = scalar_select %p77, %s78, %s79
      %p83 = pneg %p77
      %p84 = scmp.eq.s32.totalorder %s19, 1
      %p85 = por %p83, %p84
      %p86 = scmp.ne.s32.totalorder %s78, %s81
      %p87 = scmp.eq.s32.totalorder %s19, 0
      %p88 = por %p86, %p87
      %p89 = scmp.ne.s32.totalorder %s78, %s81
      %p90 = scmp.eq.s32.totalorder %s24, 1
      %p91 = por %p89, %p90
      %p92 = scmp.ne.s32.totalorder %s81, %s82
      %p93 = scmp.eq.s32.totalorder %s24, 0
      %p94 = por %p92, %p93
      %p95 = scmp.ne.s32.totalorder %s81, %s82
      %p96 = scmp.eq.s32.totalorder %s25, 1
      %p97 = por %p95, %p96
      %p99 = scmp.ne.s32.totalorder %s82, %s98
      %p100 = scmp.eq.s32.totalorder %s25, 0
      %p101 = por %p99, %p100
      %s103 = sadd.s32 %s102, 1
      %p106 = scmp.eq.s32.totalorder %s19, 1
      %p107 = scmp.ne.s32.totalorder %s102, %s104
      %p108 = scmp.eq.s32.totalorder %s19, 0
      %p109 = por %p107, %p108
      %p110 = scmp.ne.s32.totalorder %s102, %s104
      %p111 = scmp.eq.s32.totalorder %s24, 1
      %p112 = por %p110, %p111
      %p113 = scmp.ne.s32.totalorder %s104, %s105
      %p114 = scmp.eq.s32.totalorder %s24, 0
      %p115 = por %p113, %p114
      %p116 = scmp.ne.s32.totalorder %s104, %s105
      %p117 = scmp.eq.s32.totalorder %s25, 1
      %p118 = por %p116, %p117
      %p120 = scmp.ne.s32.totalorder %s105, %s119
      %p121 = scmp.eq.s32.totalorder %s25, 0
      %p122 = por %p120, %p121
      %s124 = sadd.s32 %s123, 1
      %p127 = scmp.eq.s32.totalorder %s19, 1
      %p128 = scmp.ne.s32.totalorder %s123, %s125
      %p129 = scmp.eq.s32.totalorder %s19, 0
      %p130 = por %p128, %p129
      %p131 = scmp.ne.s32.totalorder %s123, %s125
      %p132 = scmp.eq.s32.totalorder %s24, 1
      %p133 = por %p131, %p132
      %p134 = scmp.ne.s32.totalorder %s125, %s126
      %p135 = scmp.eq.s32.totalorder %s24, 0
      %p136 = por %p134, %p135
      %p137 = scmp.ne.s32.totalorder %s125, %s126
      %p138 = scmp.eq.s32.totalorder %s25, 1
      %p139 = por %p137, %p138
      %p141 = scmp.ne.s32.totalorder %s126, %s140
      %p142 = scmp.eq.s32.totalorder %s25, 0
      %p143 = por %p141, %p142
      %s144 = ssub.s32 %s26, %s45
      %s145 = ssub.s32 %s27, %s41
      %s146 = sor.u32 %s144, %s145
      %p147 = scmp.eq.s32.totalorder %s146, 0
      %s149 = sadd.s32 %s148, 1
      %s150 = scalar_select %p147, %s148, %s149
      %p153 = pneg %p147
      %p154 = scmp.eq.s32.totalorder %s19, 1
      %p155 = por %p153, %p154
      %p156 = scmp.ne.s32.totalorder %s148, %s151
      %p157 = scmp.eq.s32.totalorder %s19, 0
      %p158 = por %p156, %p157
      %p159 = scmp.ne.s32.totalorder %s148, %s151
      %p160 = scmp.eq.s32.totalorder %s24, 1
      %p161 = por %p159, %p160
      %p162 = scmp.ne.s32.totalorder %s151, %s152
      %p163 = scmp.eq.s32.totalorder %s24, 0
      %p164 = por %p162, %p163
      %p165 = scmp.ne.s32.totalorder %s151, %s152
      %p166 = scmp.eq.s32.totalorder %s25, 1
      %p167 = por %p165, %p166
      %p169 = scmp.ne.s32.totalorder %s152, %s168
      %p170 = scmp.eq.s32.totalorder %s25, 0
      %p171 = por %p169, %p170
      %p172 = scmp.le.s32.totalorder 1, %s19
      %p173 = scmp.lt.s32.totalorder %s19, 3
      %p174 = pnand %p172, %p173
      %p175 = pneg %p174
      // Predicated region
      $region9: #{tpu_custom_call.1} parent=5 // pred_check
        _
      $region10: #{tpu_custom_call.1} parent=5 // pred_check_branch
        %177 = sbr.rel (%p174) target = $region12
      $region11: #{tpu_custom_call.1} parent=5 // pred_region
        %s178 = ssub.s32 %s19, 1
        // Predicated region
        $region13: #{tpu_custom_call.1} parent=11 // pred_check
          %p179 = pneg %p115
        $region14: #{tpu_custom_call.1} parent=11 // pred_check_branch
          %181 = sbr.rel (%p179) target = $region16
        $region15: #{tpu_custom_call.1} parent=11 // pred_region
          %s183 = ssub.s32 1024, 1024
          %184 = vsyncadd [#allocation7], %s183
          %s185 = sshll.u32 [#allocation8], 4
          %s186 = int_to_ptr.vmem [resolvable:$true] %s185
          %191 = dma.hbm_to_vmem [thread:$0]  %s2, 1024, %s186, [#allocation7], 64, 64, 4
        $region16: #{tpu_custom_call.1} parent=11 // pred_fallthru
          _
        // Predicated region
        $region17: #{tpu_custom_call.1} parent=11 // pred_check
          %p192 = pneg %p136
        $region18: #{tpu_custom_call.1} parent=11 // pred_check_branch
          %194 = sbr.rel (%p192) target = $region20
        $region19: #{tpu_custom_call.1} parent=11 // pred_region
          _
        $region20: #{tpu_custom_call.1} parent=11 // pred_fallthru
          _
      $region12: #{tpu_custom_call.1} parent=5 // pred_fallthru
        _
      %p195 = scmp.lt.s32.totalorder %s19, 2
      // Predicated region
      $region21: #{tpu_custom_call.1} parent=5 // pred_check
        %p196 = pneg %p195
      $region22: #{tpu_custom_call.1} parent=5 // pred_check_branch
        %198 = sbr.rel (%p196) target = $region24
      $region23: #{tpu_custom_call.1} parent=5 // pred_region
        // Predicated region
        $region25: #{tpu_custom_call.1} parent=23 // pred_check
          %p199 = pneg %p62
        $region26: #{tpu_custom_call.1} parent=23 // pred_check_branch
          %201 = sbr.rel (%p199) target = $region28
        $region27: #{tpu_custom_call.1} parent=23 // pred_region
          %s202 = sand.u32 %s52, 1
          %s203 = scalar_lea.sflag [#allocation4], %s202
          %s204 = sand.u32 %s52, 1
          %s205 = smul.addr %s204, 16
          %s206 = scalar_lea.vmem [#allocation3], %s205
          %s207 = smul.u32 2, %s27
          %s209 = ssub.s32 256, 256
          %210 = vsyncadd %s203, %s209
          %s211 = sadd.s32 %s28, %s207
          %s212 = smul.addr %s26, 2
          %s213 = sadd.s32 %s211, %s212
          %s214 = smul.addr %s213, 128
          %s215 = scalar_lea.hbm %s0, %s214
          %s216 = sshll.u32 %s206, 4
          %s217 = int_to_ptr.vmem [resolvable:$true] %s216
          %222 = dma.hbm_to_vmem [thread:$0]  %s215, 256, %s217, %s203, 128, 128, 8
        $region28: #{tpu_custom_call.1} parent=23 // pred_fallthru
          _
        // Predicated region
        $region29: #{tpu_custom_call.1} parent=23 // pred_check
          %p223 = pneg %p88
        $region30: #{tpu_custom_call.1} parent=23 // pred_check_branch
          %225 = sbr.rel (%p223) target = $region32
        $region31: #{tpu_custom_call.1} parent=23 // pred_region
          %s226 = sand.u32 %s19, 1
          %s227 = scalar_lea.sflag [#allocation7], %s226
          %s228 = sand.u32 %s78, 1
          %s229 = smul.addr %s228, 8
          %s230 = scalar_lea.vmem [#allocation6], %s229
          %s232 = ssub.s32 128, 128
          %233 = vsyncadd %s227, %s232
          %s234 = smul.addr %s26, 2
          %s235 = smul.addr %s234, 64
          %s236 = scalar_lea.hbm %s1, %s235
          %s237 = sshll.u32 %s230, 4
          %s238 = int_to_ptr.vmem [resolvable:$true] %s237
          %243 = dma.hbm_to_vmem [thread:$0]  %s236, 128, %s238, %s227, 64, 64, 4
        $region32: #{tpu_custom_call.1} parent=23 // pred_fallthru
          _
      $region24: #{tpu_custom_call.1} parent=5 // pred_fallthru
        _
      %p244 = scmp.le.s32.totalorder 1, %s19
      %p245 = scmp.lt.s32.totalorder %s19, 3
      %p246 = pnand %p244, %p245
      %p247 = pneg %p246
      // Predicated region
      $region33: #{tpu_custom_call.1} parent=5 // pred_check
        _
      $region34: #{tpu_custom_call.1} parent=5 // pred_check_branch
        %249 = sbr.rel (%p246) target = $region36
      $region35: #{tpu_custom_call.1} parent=5 // pred_region
        %s250 = ssub.s32 %s19, 1
        %s251 = sand.u32 %s55, 1
        %s252 = scalar_lea.sflag [#allocation4], %s251
        %s253 = sand.u32 %s55, 1
        %s254 = smul.addr %s253, 16
        %s255 = scalar_lea.vmem [#allocation3], %s254
        // Predicated region
        $region37: #{tpu_custom_call.1} parent=35 // pred_check
          %p256 = pneg %p68
        $region38: #{tpu_custom_call.1} parent=35 // pred_check_branch
          %258 = sbr.rel (%p256) target = $region40
        $region39: #{tpu_custom_call.1} parent=35 // pred_region
          %259 = dma.done %s252, 256
        $region40: #{tpu_custom_call.1} parent=35 // pred_fallthru
          _
        %s260 = sand.u32 %s24, 1
        %s261 = scalar_lea.sflag [#allocation7], %s260
        %s262 = sand.u32 %s81, 1
        %s263 = smul.addr %s262, 8
        %s264 = scalar_lea.vmem [#allocation6], %s263
        // Predicated region
        $region41: #{tpu_custom_call.1} parent=35 // pred_check
          %p265 = pneg %p94
        $region42: #{tpu_custom_call.1} parent=35 // pred_check_branch
          %267 = sbr.rel (%p265) target = $region44
        $region43: #{tpu_custom_call.1} parent=35 // pred_region
          %268 = dma.done %s261, 128
        $region44: #{tpu_custom_call.1} parent=35 // pred_fallthru
          _
        // Predicated region
        $region45: #{tpu_custom_call.1} parent=35 // pred_check
          %p269 = pneg %p115
        $region46: #{tpu_custom_call.1} parent=35 // pred_check_branch
          %271 = sbr.rel (%p269) target = $region48
        $region47: #{tpu_custom_call.1} parent=35 // pred_region
          %272 = dma.done [#allocation7], 1024
        $region48: #{tpu_custom_call.1} parent=35 // pred_fallthru
          _
        %s273 = sand.u32 %s55, 1
        %s274 = scalar_lea.sflag [#allocation4], %s273
        %s275 = sand.u32 %s55, 1
        %s276 = smul.addr %s275, 16
        %s277 = scalar_lea.vmem [#allocation3], %s276
        %p278 = pneg %p68
        %p279 = pneg %p65
        %s280 = sand.u32 %s24, 1
        %s281 = scalar_lea.sflag [#allocation7], %s280
        %s282 = sand.u32 %s81, 1
        %s283 = smul.addr %s282, 8
        %s284 = scalar_lea.vmem [#allocation6], %s283
        %p285 = pneg %p94
        %p286 = pneg %p91
        %p287 = pneg %p115
        %p288 = pneg %p112
        %p289 = pneg %p136
        %p290 = pneg %p133
        %p291 = pneg %p164
        %p292 = pneg %p161
        %s293 = sand.u32 %s151, 1
        %s294 = scalar_lea.sflag [#allocation5], %s293
        %s295 = sand.u32 %s151, 1
        %s296 = smul.addr %s295, 16
        %s297 = scalar_lea.vmem [#allocation9], %s296
        %s298 = smul.u32 2, %s30
        %s299 = smul.u32 2, %s30
        %p301 = scmp.eq.s32.totalorder %s31, 0
        // Predicated region
        $region49: #{tpu_custom_call.1} parent=35 // pred_check
          %p302 = pneg %p301
        $region50: #{tpu_custom_call.1} parent=35 // pred_check_branch
          %304 = sbr.rel (%p302) target = $region52
        $region51: #{tpu_custom_call.1} parent=35 // pred_region
          %305 = vst [vmem:[#allocation2] sm:$0xff] 0.0
          %306 = vst [vmem:[#allocation2 + $0x8] sm:$0xff] 0.0
        $region52: #{tpu_custom_call.1} parent=35 // pred_fallthru
          _
        %v307 = vld [vmem:[%s255] sm:$0xff]
        %v308 = vld [vmem:[%s255 + $0x8] sm:$0xff]
        %v309 = vpack.c.bf16 %v308, %v307
        %s310 = smul.u32 %s31, 16
        %s311 = sshra.s32 %s310, 3
        %s312 = sand.u32 %s310, 7
        %s313 = smul.addr %s311, 4
        %s314 = scalar_lea.vmem %s264, %s313 [#allocation6]
        %v315 = vld [vmem:[%s314] sm:$0xf]
        %v316 = vld [vmem:[%s314 + $0x4] sm:$0xf]
        %v317 = vld [vmem:[#allocation2] sm:$0xff]
        %v318 = vld [vmem:[#allocation2 + $0x8] sm:$0xff]
        %v321 = vunpack.c.l.b16 %v315
        %v322 = vunpack.c.l.b16 %v316
        %v323 = vpack.c.b16 %v322, %v321
        %vm325 = vcmask 130048
        %v327 = vsel %vm325, %v309, 0
        %329 = vmatprep.subr.bf16.mxu0 0
        %330 = vmatpush1.bf16.msra.mxu0 %v323
        %331 = vmatprep.subr.bf16.mxu0 0
        %332 = vmatpush1.bf16.msra.mxu0 0
        %333 = vmatprep.subr.bf16.mxu0 0
        %334 = vmatpush1.bf16.msra.mxu0 0
        %335 = vmatprep.subr.bf16.mxu0 0
        %336 = vmatpush1.bf16.msra.mxu0 0
        %337 = vmatprep.subr.bf16.mxu0 0
        %338 = vmatpush1.bf16.msra.mxu0 0
        %339 = vmatprep.subr.bf16.mxu0 0
        %340 = vmatpush1.bf16.msra.mxu0 0
        %341 = vmatprep.subr.bf16.mxu0 0
        %342 = vmatpush1.bf16.msra.mxu0 0
        %343 = vmatprep.subr.bf16.mxu0 0
        %344 = vmatpush1.bf16.msra.mxu0 0
        %345 = vmatprep.subr.bf16.mxu0 0
        %346 = vmatpush1.bf16.msra.mxu0 0
        %347 = vmatprep.subr.bf16.mxu0 0
        %348 = vmatpush1.bf16.msra.mxu0 0
        %349 = vmatprep.subr.bf16.mxu0 0
        %350 = vmatpush1.bf16.msra.mxu0 0
        %351 = vmatprep.subr.bf16.mxu0 0
        %352 = vmatpush1.bf16.msra.mxu0 0
        %353 = vmatprep.subr.bf16.mxu0 0
        %354 = vmatpush1.bf16.msra.mxu0 0
        %355 = vmatprep.subr.bf16.mxu0 0
        %356 = vmatpush1.bf16.msra.mxu0 0
        %357 = vmatprep.subr.bf16.mxu0 0
        %358 = vmatpush1.bf16.msra.mxu0 0
        %359 = vmatprep.subr.bf16.mxu0 0
        %360 = vmatpush1.bf16.msra.mxu0 0
        %361 = vmatprep.mubr.bf16.mxu0 0
        %362 = vmatmul.mubr.bf16.gmra.mrb[0].mxu0 %v327
        %v363 = vpop.f32.mrb[0].mxu0
        %v364 = vadd.f32 0.0, %v363
        %v365 = vpop.f32.mrb[0].mxu0
        %v366 = vpop.f32.mrb[0].mxu0
        %v367 = vadd.f32 0.0, %v366
        %v368 = vpop.f32.mrb[0].mxu0
        %369 = vdwg.mxu0
        %v370 = vadd.f32 %v317, %v364
        %v371 = vadd.f32 %v318, %v367
        %372 = vst [vmem:[#allocation2] sm:$0xff] %v370
        %373 = vst [vmem:[#allocation2 + $0x8] sm:$0xff] %v371
        // Predicated region
        $region53: #{tpu_custom_call.1} parent=35 // pred_check
          %p374 = pneg %p301
        $region54: #{tpu_custom_call.1} parent=35 // pred_check_branch
          %376 = sbr.rel (%p374) target = $region56
        $region55: #{tpu_custom_call.1} parent=35 // pred_region
          %v377 = vld [vmem:[#allocation2] sm:$0xff]
          %v378 = vld [vmem:[#allocation2 + $0x8] sm:$0xff]
          %v379 = vpack.c.bf16 %v378, %v377
          %v380 = vld [vmem:[#allocation8] sm:$0xf]
          %v381 = vld [vmem:[#allocation8 + $0x4] sm:$0xf]
          %v382 = vld [vmem:[#allocation8 + $0x8] sm:$0xf]
          %v383 = vld [vmem:[#allocation8 + $0xc] sm:$0xf]
          %v384 = vld [vmem:[#allocation8 + $0x10] sm:$0xf]
          %v385 = vld [vmem:[#allocation8 + $0x14] sm:$0xf]
          %v386 = vld [vmem:[#allocation8 + $0x18] sm:$0xf]
          %v387 = vld [vmem:[#allocation8 + $0x1c] sm:$0xf]
          %v388 = vld [vmem:[#allocation8 + $0x20] sm:$0xf]
          %v389 = vld [vmem:[#allocation8 + $0x24] sm:$0xf]
          %v390 = vld [vmem:[#allocation8 + $0x28] sm:$0xf]
          %v391 = vld [vmem:[#allocation8 + $0x2c] sm:$0xf]
          %v392 = vld [vmem:[#allocation8 + $0x30] sm:$0xf]
          %v393 = vld [vmem:[#allocation8 + $0x34] sm:$0xf]
          %v394 = vld [vmem:[#allocation8 + $0x38] sm:$0xf]
          %v395 = vld [vmem:[#allocation8 + $0x3c] sm:$0xf]
          %v396 = vld [vmem:[%s3] sm:$0x1]
          %v398 = vlaneseq
          %v399 = vshrl.u32 %v398, 7
          %v400 = vsub.s32 0, %v399
          %v401 = vrot.slane %v396, %v400
          %v419 = vunpack.c.l.b16 %v380
          %v420 = vunpack.c.l.b16 %v381
          %v421 = vunpack.c.l.b16 %v382
          %v422 = vunpack.c.l.b16 %v383
          %v423 = vunpack.c.l.b16 %v384
          %v424 = vunpack.c.l.b16 %v385
          %v425 = vunpack.c.l.b16 %v386
          %v426 = vunpack.c.l.b16 %v387
          %v427 = vunpack.c.l.b16 %v388
          %v428 = vunpack.c.l.b16 %v389
          %v429 = vunpack.c.l.b16 %v390
          %v430 = vunpack.c.l.b16 %v391
          %v431 = vunpack.c.l.b16 %v392
          %v432 = vunpack.c.l.b16 %v393
          %v433 = vunpack.c.l.b16 %v394
          %v434 = vunpack.c.l.b16 %v395
          %v435 = vpack.c.b16 %v420, %v419
          %v436 = vpack.c.b16 %v422, %v421
          %v437 = vpack.c.b16 %v424, %v423
          %v438 = vpack.c.b16 %v426, %v425
          %v439 = vpack.c.b16 %v428, %v427
          %v440 = vpack.c.b16 %v430, %v429
          %v441 = vpack.c.b16 %v432, %v431
          %v442 = vpack.c.b16 %v434, %v433
          %451 = vmatprep.subr.bf16.mxu0 0
          %452 = vmatpush1.bf16.msra.mxu0 %v435
          %453 = vmatprep.subr.bf16.mxu0 0
          %454 = vmatpush1.bf16.msra.mxu0 %v436
          %455 = vmatprep.subr.bf16.mxu0 0
          %456 = vmatpush1.bf16.msra.mxu0 %v437
          %457 = vmatprep.subr.bf16.mxu0 0
          %458 = vmatpush1.bf16.msra.mxu0 %v438
          %459 = vmatprep.subr.bf16.mxu0 0
          %460 = vmatpush1.bf16.msra.mxu0 %v439
          %461 = vmatprep.subr.bf16.mxu0 0
          %462 = vmatpush1.bf16.msra.mxu0 %v440
          %463 = vmatprep.subr.bf16.mxu0 0
          %464 = vmatpush1.bf16.msra.mxu0 %v441
          %465 = vmatprep.subr.bf16.mxu0 0
          %466 = vmatpush1.bf16.msra.mxu0 %v442
          %467 = vmatprep.subr.bf16.mxu0 0
          %468 = vmatpush1.bf16.msra.mxu0 0
          %469 = vmatprep.subr.bf16.mxu0 0
          %470 = vmatpush1.bf16.msra.mxu0 0
          %471 = vmatprep.subr.bf16.mxu0 0
          %472 = vmatpush1.bf16.msra.mxu0 0
          %473 = vmatprep.subr.bf16.mxu0 0
          %474 = vmatpush1.bf16.msra.mxu0 0
          %475 = vmatprep.subr.bf16.mxu0 0
          %476 = vmatpush1.bf16.msra.mxu0 0
          %477 = vmatprep.subr.bf16.mxu0 0
          %478 = vmatpush1.bf16.msra.mxu0 0
          %479 = vmatprep.subr.bf16.mxu0 0
          %480 = vmatpush1.bf16.msra.mxu0 0
          %481 = vmatprep.subr.bf16.mxu0 0
          %482 = vmatpush1.bf16.msra.mxu0 0
          %483 = vmatprep.mubr.bf16.mxu0 0
          %484 = vmatmul.mubr.bf16.gmra.mrb[0].mxu0 %v379
          %v485 = vpop.f32.mrb[0].mxu0
          %v486 = vadd.f32 %v401, %v485
          %v487 = vpop.f32.mrb[0].mxu0
          %v488 = vpop.f32.mrb[0].mxu0
          %v489 = vadd.f32 %v401, %v488
          %v490 = vpop.f32.mrb[0].mxu0
          %491 = vdwg.mxu0
          %v492 = vmax.f32 %v486, 0.0
          %v493 = vmax.f32 %v489, 0.0
          %494 = vst [vmem:[%s297] sm:$0xff] %v492
          %495 = vst [vmem:[%s297 + $0x8] sm:$0xff] %v493
        $region56: #{tpu_custom_call.1} parent=35 // pred_fallthru
          _
        %s496 = sand.u32 %s151, 1
        %s497 = scalar_lea.sflag [#allocation5], %s496
        %s498 = sand.u32 %s151, 1
        %s499 = smul.addr %s498, 16
        %s500 = scalar_lea.vmem [#allocation9], %s499
        // Predicated region
        $region57: #{tpu_custom_call.1} parent=35 // pred_check
          %p501 = pneg %p161
        $region58: #{tpu_custom_call.1} parent=35 // pred_check_branch
          %503 = sbr.rel (%p501) target = $region60
        $region59: #{tpu_custom_call.1} parent=35 // pred_region
          %s504 = smul.u32 2, %s30
          %s506 = ssub.s32 256, 256
          %507 = vsyncadd %s497, %s506
          %s508 = smul.addr %s29, 2
          %s509 = sadd.s32 %s504, %s508
          %s510 = smul.addr %s509, 128
          %s511 = scalar_lea.hbm %s4, %s510
          %s512 = sshll.u32 %s500, 4
          %s513 = int_to_ptr.vmem [resolvable:$true] %s512
          %518 = dma.vmem_to_hbm [thread:$0]  %s513, 256, %s511, %s497, 128, 128, 8
        $region60: #{tpu_custom_call.1} parent=35 // pred_fallthru
          _
      $region36: #{tpu_custom_call.1} parent=5 // pred_fallthru
        _
      %p519 = scmp.le.s32.totalorder 2, %s19
      // Predicated region
      $region61: #{tpu_custom_call.1} parent=5 // pred_check
        %p520 = pneg %p519
      $region62: #{tpu_custom_call.1} parent=5 // pred_check_branch
        %522 = sbr.rel (%p520) target = $region64
      $region63: #{tpu_custom_call.1} parent=5 // pred_region
        %s523 = ssub.s32 %s19, 2
        // Predicated region
        $region65: #{tpu_custom_call.1} parent=63 // pred_check
          %p524 = pneg %p167
        $region66: #{tpu_custom_call.1} parent=63 // pred_check_branch
          %526 = sbr.rel (%p524) target = $region68
        $region67: #{tpu_custom_call.1} parent=63 // pred_region
          %s527 = sand.u32 %s152, 1
          %s528 = scalar_lea.sflag [#allocation5], %s527
          %s529 = sand.u32 %s152, 1
          %s530 = smul.addr %s529, 16
          %s531 = scalar_lea.vmem [#allocation9], %s530
          %532 = dma.done %s528, 256
        $region68: #{tpu_custom_call.1} parent=63 // pred_fallthru
          _
      $region64: #{tpu_custom_call.1} parent=5 // pred_fallthru
        _
    $region6: #{tpu_custom_call.1} parent=1 // loop_footer
      %s23 = sadd.s32 1, %s19
    $region7: #{tpu_custom_call.1} parent=1 // loop_footer_branch
      %18 = sbr.rel target = $region3
    $region8: #{tpu_custom_call.1} parent=1 // loop_exit
      _
    %533 = vsyncpa [#allocation4], 1
    %s534 = scalar_lea.sflag [#allocation4], 1
    %535 = vsyncpa %s534, 1
    %536 = vsyncpa [#allocation7], 1
    %s537 = scalar_lea.sflag [#allocation7], 1
    %538 = vsyncpa %s537, 1
    %539 = vsyncpa [#allocation5], 1
    %s540 = scalar_lea.sflag [#allocation5], 1
    %541 = vsyncpa %s540, 1

</llo_original>
